<compile_context>
chip_gen: v6e
topology: v6e:2x2x1
jax: 0.10.0
libtpu: 0.0.40
codegen_flags: <defaults>
</compile_context>

<pallas_src>
import jax
import jax.numpy as jnp
from jax.experimental import pallas as pl
from jax.experimental.pallas import tpu as pltpu


# --------------------------------------------------------------------------- #
# Kernels
# --------------------------------------------------------------------------- #
def _woq_kernel_sym(x_ref, w_ref, qp_ref, o_ref, acc_ref):
    """Symmetric (zp == 0) WOQ linear tile. Reduction over grid axis 2.

    x_ref:   (tm, tk)  f32/bf16 activations (cast to bf16 in-kernel if needed)
    w_ref:   (tk, tn)  int8 quantized weight, [K, N] layout
    qp_ref:  (2,  tn)  f32 packed qparams: row0=scale, row1=bias
    o_ref:   (tm, tn)  output (written only on the last k step)
    acc_ref: (tm, tn)  f32 VMEM accumulator scratch
    """
    k = pl.program_id(2)

    @pl.when(k == 0)
    def _():
        acc_ref[...] = jnp.zeros_like(acc_ref)

    # int8 -> bf16 is exact; MXU runs bf16 x bf16 with f32 accumulation.
    acc_ref[...] += jnp.dot(
        x_ref[...].astype(jnp.bfloat16),
        w_ref[...].astype(jnp.bfloat16),
        preferred_element_type=jnp.float32,
    )

    @pl.when(k == pl.num_programs(2) - 1)
    def _():
        scale = qp_ref[0:1, :]                        # (1, tn)
        bias = qp_ref[1:2, :]                         # (1, tn)
        o_ref[...] = (acc_ref[...] * scale + bias).astype(o_ref.dtype)


def _woq_kernel_asym(x_ref, w_ref, rowsum_ref, qp_ref, o_ref, acc_ref):
    """Affine (zp != 0) WOQ linear tile with hoisted zero-point correction.

    rowsum_ref: (tm, 1) f32 per-row sum of activations
    qp_ref:     (3, tn) f32 packed qparams: row0=scale, row1=zp, row2=bias
    """
    k = pl.program_id(2)

    @pl.when(k == 0)
    def _():
        acc_ref[...] = jnp.zeros_like(acc_ref)

    acc_ref[...] += jnp.dot(
        x_ref[...].astype(jnp.bfloat16),
        w_ref[...].astype(jnp.bfloat16),
        preferred_element_type=jnp.float32,
    )

    @pl.when(k == pl.num_programs(2) - 1)
    def _():
        scale = qp_ref[0:1, :]
        zp = qp_ref[1:2, :]
        bias = qp_ref[2:3, :]
        corr = rowsum_ref[...] * zp                   # (tm,1)*(1,tn) -> (tm,tn)
        o_ref[...] = ((acc_ref[...] - corr) * scale + bias).astype(o_ref.dtype)


# --------------------------------------------------------------------------- #
# Tiling helpers
# --------------------------------------------------------------------------- #
def _round_up(a, b):
    return -(-a // b) * b


def _divisor_tiles(dim, quantum, cap, floor):
    """Multiples of `quantum` dividing `dim`, descending, within [floor, cap]."""
    floor = min(floor, dim)

    def collect(fl):
        out = []
        c = min(cap, dim)
        c -= c % quantum
        while c >= quantum:
            if dim % c == 0 and c >= fl:
                out.append(c)
            c -= quantum
        return out

    cands = collect(floor) or collect(quantum)
    return cands or [dim]


def _vmem_budget_and_limit():
    """Per-generation VMEM tile budget + scoped limit (v7x has only 64 MiB)."""
    try:
        cap = int(pltpu.get_tpu_info().vmem_capacity_bytes)
    except Exception:
        cap = 64 << 20                                  # conservative fallback
    budget = min(cap // 2, 48 << 20)                    # tile footprint target
    limit = max(min(cap - (16 << 20), 100 << 20), 32 << 20)
    return budget, limit


# --------------------------------------------------------------------------- #
# Forward wrapper
# --------------------------------------------------------------------------- #
def ipex_woq_linear_forward(x, packed, *, out_dtype=jnp.float32):
    """Weight-only-quantized linear forward (IpexWoqLinear.forward equivalent).

    x:      float32/bfloat16 [..., K]
    packed: dict from woq_prepack (padded int8 weight, packed qparams, flags)
    """
    K = packed["in_features"]
    N = packed["out_features"]
    qw = packed["qweight"]                              # (K_pad, N_pad) int8
    qp = packed["qparams"]                              # (2|3, N_pad) f32
    symmetric = packed["symmetric"]
    K_pad, N_pad = qw.shape

    orig_shape = x.shape
    assert orig_shape[-1] == K, "activation K dim mismatch"
    x2d = x.reshape(-1, K)
    M = x2d.shape[0]
    x_in_bytes = jnp.dtype(x2d.dtype).itemsize
    out_bytes = jnp.dtype(out_dtype).itemsize

    budget, vmem_limit = _vmem_budget_and_limit()

    # ---- tile candidates ----------------------------------------------------
    if M <= 1024:
        tm_cands = [M]                                  # full-extent M block, no pad
    else:
        tm_cands = [1024, 512, 256, 128]
    tn_cands = _divisor_tiles(N_pad, 128, 2048, min(N_pad, 256))
    tk_cands = _divisor_tiles(K_pad, 128, 2048, min(K_pad, 512))

    def footprint(tm_, tn_, tk_):
        fb = 2 * tm_ * tk_ * x_in_bytes                 # x double-buffer
        if x_in_bytes > 2:
            fb += tm_ * tk_ * 2                         # in-kernel bf16 cast temp (x)
        fb += 2 * tk_ * tn_ * 1                         # int8 weight double-buffer
        fb += tk_ * tn_ * 2                             # bf16 weight cast temp
        fb += 2 * tm_ * tn_ * out_bytes                 # output double-buffer
        fb += tm_ * tn_ * 4                             # f32 accumulator scratch
        fb += 2 * 8 * tn_ * 4                           # packed qparams (8-sublane pad)
        if not symmetric:
            fb += 2 * tm_ * 128 * 4                     # rowsum (lane-padded)
        return fb

    chosen = None
    for tm_ in tm_cands:                                # keep tm big (weight re-reads)
        for tn_ in tn_cands:                            # then tn big (x re-reads)
            for tk_ in tk_cands:                        # shrink tk first (overhead only)
                if footprint(tm_, tn_, tk_) <= budget:
                    chosen = (tm_, tn_, tk_)
                    break
            if chosen:
                break
        if chosen:
            break
    if chosen is None:
        chosen = (tm_cands[-1], tn_cands[-1], tk_cands[-1])
    tm, tn, tk = chosen
    M_pad = _round_up(M, tm)

    # Give both TensorCores (v7x megacore) >= 2 parallel blocks when possible.
    if (M_pad // tm) * (N_pad // tn) < 2:
        for cand in tn_cands:
            if cand < tn and cand >= 256 and (N_pad // cand) >= 2:
                tn = cand
                break

    # ---- activation prep: avoid standalone wrapper passes where possible -----
    n_x_reads = N_pad // tn
    cast_in_wrapper = (x2d.dtype != jnp.bfloat16) and (n_x_reads > 3)
    if cast_in_wrapper:
        x2d = x2d.astype(jnp.bfloat16)                  # fuses with pad below
    if (M_pad != M) or (K_pad != K):
        x2d = jnp.pad(x2d, ((0, M_pad - M), (0, K_pad - K)))

    # ---- pallas_call ----------------------------------------------------------
    grid = (M_pad // tm, N_pad // tn, K_pad // tk)
    in_specs = [
        pl.BlockSpec((tm, tk), lambda i, j, k: (i, k)),          # x
        pl.BlockSpec((tk, tn), lambda i, j, k: (k, j)),          # qweight [K, N] int8
    ]
    args = [x2d, qw]
    if symmetric:
        kernel = _woq_kernel_sym
    else:
        kernel = _woq_kernel_asym
        rowsum = jnp.sum(x2d.astype(jnp.bfloat16).astype(jnp.float32),
                         axis=1, keepdims=True)                  # (M_pad, 1)
        in_specs.append(pl.BlockSpec((tm, 1), lambda i, j, k: (i, 0)))
        args.append(rowsum)
    in_specs.append(pl.BlockSpec((qp.shape[0], tn), lambda i, j, k: (0, j)))
    args.append(qp)

    out = pl.pallas_call(
        kernel,
        out_shape=jax.ShapeDtypeStruct((M_pad, N_pad), out_dtype),
        grid_spec=pltpu.PrefetchScalarGridSpec(
            num_scalar_prefetch=0,
            grid=grid,
            in_specs=in_specs,
            out_specs=pl.BlockSpec((tm, tn), lambda i, j, k: (i, j)),
            scratch_shapes=[pltpu.VMEM((tm, tn), jnp.float32)],
        ),
        compiler_params=pltpu.CompilerParams(
            dimension_semantics=("parallel", "parallel", "arbitrary"),
            vmem_limit_bytes=int(vmem_limit),
        ),
    )(*args)

    if (M_pad != M) or (N_pad != N):
        out = out[:M, :N]
    return out.reshape(*orig_shape[:-1], N)


# --------------------------------------------------------------------------- #
# Prepack (plain JAX glue, run once) — emulates _quantize_weight + prepack
# --------------------------------------------------------------------------- #
def woq_prepack(w_float, bias=None, *, symmetric=True):
    """Per-channel qint8 quantize + transpose + pad + pack qparams.

    w_float: [N, K] float (torch nn.Linear weight convention)
    returns dict with padded [K_pad, N_pad] int8 weight and packed qparams.
    """
    N, K = w_float.shape
    w_float = w_float.astype(jnp.float32)
    if symmetric:
        max_abs = jnp.max(jnp.abs(w_float), axis=1, keepdims=True)       # (N,1)
        scales = jnp.maximum(max_abs / 127.0, 1e-8)
        zps = jnp.zeros_like(scales)
        q = jnp.clip(jnp.round(w_float / scales), -127, 127)
    else:
        wmin = jnp.minimum(jnp.min(w_float, axis=1, keepdims=True), 0.0)
        wmax = jnp.maximum(jnp.max(w_float, axis=1, keepdims=True), 0.0)
        scales = jnp.maximum((wmax - wmin) / 255.0, 1e-8)
        zps = jnp.round(-128.0 - wmin / scales)
        q = jnp.clip(jnp.round(w_float / scales) + zps, -128, 127)
    q = q.astype(jnp.int8)

    if bias is None:
        bias = jnp.zeros((N,), jnp.float32)
    bias = bias.astype(jnp.float32).reshape(N)

    # Pad to lane/tile-friendly sizes at prepack time (free; avoids full-extent
    # tile fallbacks, masked partial stores and runtime weight pads).
    K_pad = _round_up(K, 128)
    N_pad = _round_up(N, 512) if N >= 512 else _round_up(N, 128)

    qweight_kn = jnp.zeros((K_pad, N_pad), jnp.int8).at[:K, :N].set(q.T)
    scale_row = jnp.zeros((N_pad,), jnp.float32).at[:N].set(scales[:, 0])
    zp_row = jnp.zeros((N_pad,), jnp.float32).at[:N].set(zps[:, 0])
    bias_row = jnp.zeros((N_pad,), jnp.float32).at[:N].set(bias)
    if symmetric:
        qparams = jnp.stack([scale_row, bias_row], axis=0)               # (2, N_pad)
    else:
        qparams = jnp.stack([scale_row, zp_row, bias_row], axis=0)       # (3, N_pad)

    return {
        "qweight": qweight_kn,
        "qparams": qparams,
        "symmetric": symmetric,
        "in_features": K,
        "out_features": N,
    }


def _reference_forward(x, packed):
    """Pure-JAX reference: dequantize + full-precision GEMM on bf16-rounded x."""
    K = packed["in_features"]
    N = packed["out_features"]
    q = packed["qweight"][:K, :N].astype(jnp.float32)
    qp = packed["qparams"]
    scale = qp[0, :N]
    bias = qp[-1, :N]
    zp = qp[1, :N] if not packed["symmetric"] else jnp.zeros((N,), jnp.float32)
    w_deq = (q - zp[None, :]) * scale[None, :]                            # (K, N)
    x_bf = x.astype(jnp.bfloat16).astype(jnp.float32)
    y = jnp.einsum("...k,kn->...n", x_bf, w_deq,
                   precision=jax.lax.Precision.HIGHEST)
    return y + bias


# --------------------------------------------------------------------------- #
# Self-test
# --------------------------------------------------------------------------- #
if __name__ == "__main__":
    batch, seq = 2, 8
    key = jax.random.PRNGKey(0)
    k1, k2, k3, k4, k5, k6 = jax.random.split(key, 6)

    # --- Test 1: per-channel symmetric qint8 (default IPEX qconfig path) ------
    in_f, out_f = 256, 256
    x = jax.random.normal(k1, (batch, seq, in_f), dtype=jnp.float32)
    w = jax.random.normal(k2, (out_f, in_f), dtype=jnp.float32) * 0.05
    b = jax.random.normal(k3, (out_f,), dtype=jnp.float32) * 0.1

    packed = woq_prepack(w, b, symmetric=True)
    y = jax.block_until_ready(ipex_woq_linear_forward(x, packed))
    y_ref = _reference_forward(x, packed)
    assert y.shape == (batch, seq, out_f)
    assert jnp.allclose(y, y_ref, atol=3e-3, rtol=3e-3), "symmetric path mismatch"

    # --- Test 2: per-channel affine (non-zero zp) + non-128-aligned K/N -------
    in_f2, out_f2 = 192, 200
    x2 = jax.random.normal(k4, (batch, seq, in_f2), dtype=jnp.float32)
    w2 = jax.random.normal(k5, (out_f2, in_f2), dtype=jnp.float32) * 0.05 + 0.01
    b2 = jax.random.normal(k6, (out_f2,), dtype=jnp.float32) * 0.1

    packed2 = woq_prepack(w2, b2, symmetric=False)
    y2 = jax.block_until_ready(ipex_woq_linear_forward(x2, packed2))
    y2_ref = _reference_forward(x2, packed2)
    assert y2.shape == (batch, seq, out_f2)
    assert jnp.allclose(y2, y2_ref, atol=3e-3, rtol=3e-3), "affine path mismatch"

    print("KERNEL_OK")
</pallas_src>

<mosaic_0001>
module attributes {stable_mosaic.version = 11 : i64} {
  func.func @_woq_kernel_sym(%arg0: i32, %arg1: i32, %arg2: i32, %arg3: memref<16x256xf32, #tpu.memory_space<vmem>>, %arg4: memref<256x256xi8, #tpu.memory_space<vmem>>, %arg5: memref<2x256xf32, #tpu.memory_space<vmem>>, %arg6: memref<16x256xf32, #tpu.memory_space<vmem>>, %arg7: memref<16x256xf32, #tpu.memory_space<vmem>>) attributes {dimension_semantics = [#tpu.dimension_semantics<parallel>, #tpu.dimension_semantics<parallel>, #tpu.dimension_semantics<arbitrary>], iteration_bounds = array<i64: 1, 1, 1>, scalar_prefetch = 0 : i64, scratch_operands = 1 : i64, tpu.core_type = #tpu.core_type<tc>, window_params = [{transform_indices = @transform_0, window_bounds = array<i64: 16, 256>}, {transform_indices = @transform_1, window_bounds = array<i64: 256, 256>}, {transform_indices = @transform_2, window_bounds = array<i64: 2, 256>}, {transform_indices = @transform_3, window_bounds = array<i64: 16, 256>}]} {
    %c0_i32 = arith.constant 0 : i32
    %0 = arith.cmpi eq, %arg2, %c0_i32 : i32
    %1 = arith.extui %0 : i1 to i32
    %c0_i32_0 = arith.constant 0 : i32
    %2 = arith.cmpi ne, %1, %c0_i32_0 : i32
    scf.if %2 {
      %cst_10 = arith.constant 0.000000e+00 : f32
      %14 = vector.broadcast %cst_10 : f32 to vector<16x256xf32>
      %c0_11 = arith.constant 0 : index
      %c0_12 = arith.constant 0 : index
      %15 = vector.load %arg7[%c0_11, %c0_12] : memref<16x256xf32, #tpu.memory_space<vmem>>, vector<16x256xf32>
      tpu.vector_store %arg7[%c0_11, %c0_12], %14 {strides = array<i32>} : memref<16x256xf32, #tpu.memory_space<vmem>>, vector<16x256xf32>,
    } else {
    }
    %c0 = arith.constant 0 : index
    %c0_1 = arith.constant 0 : index
    %3 = vector.load %arg7[%c0, %c0_1] : memref<16x256xf32, #tpu.memory_space<vmem>>, vector<16x256xf32>
    %c0_2 = arith.constant 0 : index
    %c0_3 = arith.constant 0 : index
    %4 = vector.load %arg3[%c0_2, %c0_3] : memref<16x256xf32, #tpu.memory_space<vmem>>, vector<16x256xf32>
    %5 = arith.truncf %4 : vector<16x256xf32> to vector<16x256xbf16>
    %c0_4 = arith.constant 0 : index
    %c0_5 = arith.constant 0 : index
    %6 = vector.load %arg4[%c0_4, %c0_5] : memref<256x256xi8, #tpu.memory_space<vmem>>, vector<256x256xi8>
    %7 = arith.sitofp %6 : vector<256x256xi8> to vector<256x256xbf16>
    %cst = arith.constant dense<0.000000e+00> : vector<16x256xf32>
    %8 = tpu.matmul %5, %7, %cst {dimension_numbers = #tpu.dot_dimension_numbers<[1], [0], [0], [1], [0, 0, 1, 1], [], []>} : vector<16x256xbf16>, vector<256x256xbf16>, vector<16x256xf32> -> vector<16x256xf32>
    %9 = arith.addf %3, %8 : vector<16x256xf32>
    %c0_6 = arith.constant 0 : index
    %c0_7 = arith.constant 0 : index
    %10 = vector.load %arg7[%c0_6, %c0_7] : memref<16x256xf32, #tpu.memory_space<vmem>>, vector<16x256xf32>
    tpu.vector_store %arg7[%c0_6, %c0_7], %9 {strides = array<i32>} : memref<16x256xf32, #tpu.memory_space<vmem>>, vector<16x256xf32>,
    %c0_i32_8 = arith.constant 0 : i32
    %11 = arith.cmpi eq, %arg2, %c0_i32_8 : i32
    %12 = arith.extui %11 : i1 to i32
    %c0_i32_9 = arith.constant 0 : i32
    %13 = arith.cmpi ne, %12, %c0_i32_9 : i32
    scf.if %13 {
      %c0_10 = arith.constant 0 : index
      %c0_11 = arith.constant 0 : index
      %14 = vector.load %arg5[%c0_10, %c0_11] : memref<2x256xf32, #tpu.memory_space<vmem>>, vector<1x256xf32>
      %c1 = arith.constant 1 : index
      %c0_12 = arith.constant 0 : index
      %15 = vector.load %arg5[%c1, %c0_12] : memref<2x256xf32, #tpu.memory_space<vmem>>, vector<1x256xf32>
      %c0_13 = arith.constant 0 : index
      %c0_14 = arith.constant 0 : index
      %16 = vector.load %arg7[%c0_13, %c0_14] : memref<16x256xf32, #tpu.memory_space<vmem>>, vector<16x256xf32>
      %17 = vector.broadcast %14 : vector<1x256xf32> to vector<16x256xf32>
      %18 = arith.mulf %16, %17 : vector<16x256xf32>
      %19 = vector.broadcast %15 : vector<1x256xf32> to vector<16x256xf32>
      %20 = arith.addf %18, %19 : vector<16x256xf32>
      %c0_15 = arith.constant 0 : index
      %c0_16 = arith.constant 0 : index
      %21 = vector.load %arg6[%c0_15, %c0_16] : memref<16x256xf32, #tpu.memory_space<vmem>>, vector<16x256xf32>
      tpu.vector_store %arg6[%c0_15, %c0_16], %20 {strides = array<i32>} : memref<16x256xf32, #tpu.memory_space<vmem>>, vector<16x256xf32>,
    } else {
    }
    return
  }
  func.func @transform_0(%arg0: i32, %arg1: i32, %arg2: i32) -> (i32, i32) {
    %c0_i32 = arith.constant 0 : i32
    return %arg0, %arg2 : i32, i32
  }
  func.func @transform_1(%arg0: i32, %arg1: i32, %arg2: i32) -> (i32, i32) {
    %c0_i32 = arith.constant 0 : i32
    return %arg2, %arg1 : i32, i32
  }
  func.func @transform_2(%arg0: i32, %arg1: i32, %arg2: i32) -> (i32, i32) {
    %c0_i32 = arith.constant 0 : i32
    %c0_i32_0 = arith.constant 0 : i32
    return %c0_i32, %arg1 : i32, i32
  }
  func.func @transform_3(%arg0: i32, %arg1: i32, %arg2: i32) -> (i32, i32) {
    %c0_i32 = arith.constant 0 : i32
    return %arg0, %arg1 : i32, i32
  }
}

</mosaic_0001>

<llo_original>
// kernel: tpu_custom_call.1
$region0: #{tpu_custom_call.1}
  #allocation0 [shape = 'u32[]', space=smem, size = 0x4, offset = 0x4, fixed_abs, tag = 'smem constant byte address 0x4 - core index']
  #allocation1 [shape = 'u32[144,128]{1,0:T(1,128)}', space=vmem, size = 0x12000, scoped, tag = 'internal scratch']
  #allocation2 [shape = 'f32[16,256]{1,0:T(8,128)}', space=vmem, size = 0x4000, scoped, tag = 'scratch operand']
  %s0 = inlined_call_operand.hbm [shape: f32[16,256], index: 0, kind: input, shape index: {}]
  %s1 = inlined_call_operand.hbm [shape: s8[256,256], index: 1, kind: input, shape index: {}]
  %s2 = inlined_call_operand.hbm [shape: f32[2,256], index: 2, kind: input, shape index: {}]
  %s3 = inlined_call_operand.hbm [shape: f32[16,256], index: 3, kind: output, shape index: {}]
  %s4 = sld [smem:[#allocation0]]
  $region42: #{tpu_custom_call.1} parent=0
    _
  %s6 = ssub.s32 1, %s4
  %s7 = scalar_select 0, %s6, %s4
  $region1: #{tpu_custom_call.1} parent=0
    #allocation3 [shape = 'u8[16384]{0}', space=vmem, size = 0x4000, scoped, tag = 'input window, operand 0, single buffered']
    #allocation4 [shape = 's32[1]{0}', space=sflag, size = 0x4, scoped, tag = 'scoped memory for tpu_custom_call.1']
    #allocation5 [shape = 's32[1]{0}', space=sflag, size = 0x4, scoped, tag = 'scoped memory for tpu_custom_call.1']
    #allocation6 [shape = 'u8[65536]{0}', space=vmem, size = 0x10000, scoped, tag = 'input window, operand 1, single buffered']
    #allocation7 [shape = 's32[1]{0}', space=sflag, size = 0x4, scoped, tag = 'scoped memory for tpu_custom_call.1']
    #allocation8 [shape = 'u8[2048]{0}', space=vmem, size = 0x800, scoped, tag = 'input window, operand 2, single buffered']
    #allocation9 [shape = 'u8[16384]{0}', space=vmem, size = 0x4000, scoped, tag = 'output window, operand 0, single buffered']
    %8 = vsyncpa [#allocation4], 0
    %9 = vsyncpa [#allocation7], 0
    %10 = vsyncpa [#allocation5], 0
    // Predicated region
    $region2: #{tpu_custom_call.1} parent=1 // pred_check
      _
    $region3: #{tpu_custom_call.1} parent=1 // pred_check_branch
      %12 = sbr.rel (0) target = $region5
    $region4: #{tpu_custom_call.1} parent=1 // pred_region
      %s14 = ssub.s32 512, 512
      %15 = vsyncadd [#allocation4], %s14
      %s16 = sshll.u32 [#allocation3], 4
      %s17 = int_to_ptr.vmem [resolvable:$true] %s16
      %22 = dma.hbm_to_vmem [thread:$0]  %s0, 512, %s17, [#allocation4], 256, 256, 16
    $region5: #{tpu_custom_call.1} parent=1 // pred_fallthru
      _
    // Predicated region
    $region6: #{tpu_custom_call.1} parent=1 // pred_check
      _
    $region7: #{tpu_custom_call.1} parent=1 // pred_check_branch
      %24 = sbr.rel (0) target = $region9
    $region8: #{tpu_custom_call.1} parent=1 // pred_region
      %s26 = ssub.s32 2048, 2048
      %27 = vsyncadd [#allocation7], %s26
      %s28 = sshll.u32 [#allocation6], 4
      %s29 = int_to_ptr.vmem [resolvable:$true] %s28
      %34 = dma.hbm_to_vmem [thread:$0]  %s1, 2048, %s29, [#allocation7], 256, 256, 16
    $region9: #{tpu_custom_call.1} parent=1 // pred_fallthru
      _
    // Predicated region
    $region10: #{tpu_custom_call.1} parent=1 // pred_check
      _
    $region11: #{tpu_custom_call.1} parent=1 // pred_check_branch
      %36 = sbr.rel (0) target = $region13
    $region12: #{tpu_custom_call.1} parent=1 // pred_region
      %s38 = ssub.s32 64, 64
      %39 = vsyncadd [#allocation7], %s38
      %s41 = sshll.u32 [#allocation8], 4
      %s42 = int_to_ptr.vmem [resolvable:$true] %s41
      %44 = dma.hbm_to_vmem [thread:$0]  %s2, 64, %s42, [#allocation7]
    $region13: #{tpu_custom_call.1} parent=1 // pred_fallthru
      _
    // Predicated region
    $region14: #{tpu_custom_call.1} parent=1 // pred_check
      _
    $region15: #{tpu_custom_call.1} parent=1 // pred_check_branch
      %46 = sbr.rel (0) target = $region17
    $region16: #{tpu_custom_call.1} parent=1 // pred_region
      %47 = dma.done [#allocation4], 512
    $region17: #{tpu_custom_call.1} parent=1 // pred_fallthru
      _
    // Predicated region
    $region18: #{tpu_custom_call.1} parent=1 // pred_check
      _
    $region19: #{tpu_custom_call.1} parent=1 // pred_check_branch
      %49 = sbr.rel (0) target = $region21
    $region20: #{tpu_custom_call.1} parent=1 // pred_region
      %50 = dma.done [#allocation7], 2048
    $region21: #{tpu_custom_call.1} parent=1 // pred_fallthru
      _
    // Predicated region
    $region22: #{tpu_custom_call.1} parent=1 // pred_check
      _
    $region23: #{tpu_custom_call.1} parent=1 // pred_check_branch
      %52 = sbr.rel (0) target = $region25
    $region24: #{tpu_custom_call.1} parent=1 // pred_region
      %53 = dma.done [#allocation7], 64
    $region25: #{tpu_custom_call.1} parent=1 // pred_fallthru
      _
    %p54 = scmp.eq.s32.totalorder 0, 0
    // Predicated region
    $region26: #{tpu_custom_call.1} parent=1 // pred_check
      %p55 = pneg %p54
    $region27: #{tpu_custom_call.1} parent=1 // pred_check_branch
      %57 = sbr.rel (%p55) target = $region29
    $region28: #{tpu_custom_call.1} parent=1 // pred_region
      %58 = vst [vmem:[#allocation2] sm:$0xff] 0.0
      %59 = vst [vmem:[#allocation2 + $0x8] sm:$0xff] 0.0
      %60 = vst [vmem:[#allocation2 + $0x10] sm:$0xff] 0.0
      %61 = vst [vmem:[#allocation2 + $0x18] sm:$0xff] 0.0
    $region29: #{tpu_custom_call.1} parent=1 // pred_fallthru
      _
    %v62 = vld [vmem:[#allocation2] sm:$0xff]
    %v63 = vld [vmem:[#allocation2 + $0x8] sm:$0xff]
    %v64 = vld [vmem:[#allocation2 + $0x10] sm:$0xff]
    %v65 = vld [vmem:[#allocation2 + $0x18] sm:$0xff]
    %v66 = vld [vmem:[#allocation3] sm:$0xff]
    %v67 = vld [vmem:[#allocation3 + $0x8] sm:$0xff]
    %v68 = vld [vmem:[#allocation3 + $0x10] sm:$0xff]
    %v69 = vld [vmem:[#allocation3 + $0x18] sm:$0xff]
    %v70 = vpack.c.bf16 %v68, %v66
    %v71 = vpack.c.bf16 %v69, %v67
    %v72 = vld [vmem:[#allocation6] sm:$0xff]
    %v73 = vld [vmem:[#allocation6 + $0x8] sm:$0xff]
    %v74 = vld [vmem:[#allocation6 + $0x10] sm:$0xff]
    %v75 = vld [vmem:[#allocation6 + $0x18] sm:$0xff]
    %v76 = vld [vmem:[#allocation6 + $0x20] sm:$0xff]
    %v77 = vld [vmem:[#allocation6 + $0x28] sm:$0xff]
    %v78 = vld [vmem:[#allocation6 + $0x30] sm:$0xff]
    %v79 = vld [vmem:[#allocation6 + $0x38] sm:$0xff]
    %v80 = vld [vmem:[#allocation6 + $0x40] sm:$0xff]
    %v81 = vld [vmem:[#allocation6 + $0x48] sm:$0xff]
    %v82 = vld [vmem:[#allocation6 + $0x50] sm:$0xff]
    %v83 = vld [vmem:[#allocation6 + $0x58] sm:$0xff]
    %v84 = vld [vmem:[#allocation6 + $0x60] sm:$0xff]
    %v85 = vld [vmem:[#allocation6 + $0x68] sm:$0xff]
    %v86 = vld [vmem:[#allocation6 + $0x70] sm:$0xff]
    %v87 = vld [vmem:[#allocation6 + $0x78] sm:$0xff]
    %v88 = vunpack.c.l.s8.bf16 %v72
    %v89 = vunpack.c.l.s8.bf16 %v73
    %v90 = vunpack.c.h.s8.bf16 %v72
    %v91 = vunpack.c.h.s8.bf16 %v73
    %v92 = vunpack.c.l.s8.bf16 %v74
    %v93 = vunpack.c.l.s8.bf16 %v75
    %v94 = vunpack.c.h.s8.bf16 %v74
    %v95 = vunpack.c.h.s8.bf16 %v75
    %v96 = vunpack.c.l.s8.bf16 %v76
    %v97 = vunpack.c.l.s8.bf16 %v77
    %v98 = vunpack.c.h.s8.bf16 %v76
    %v99 = vunpack.c.h.s8.bf16 %v77
    %v100 = vunpack.c.l.s8.bf16 %v78
    %v101 = vunpack.c.l.s8.bf16 %v79
    %v102 = vunpack.c.h.s8.bf16 %v78
    %v103 = vunpack.c.h.s8.bf16 %v79
    %v104 = vunpack.c.l.s8.bf16 %v80
    %v105 = vunpack.c.l.s8.bf16 %v81
    %v106 = vunpack.c.h.s8.bf16 %v80
    %v107 = vunpack.c.h.s8.bf16 %v81
    %v108 = vunpack.c.l.s8.bf16 %v82
    %v109 = vunpack.c.l.s8.bf16 %v83
    %v110 = vunpack.c.h.s8.bf16 %v82
    %v111 = vunpack.c.h.s8.bf16 %v83
    %v112 = vunpack.c.l.s8.bf16 %v84
    %v113 = vunpack.c.l.s8.bf16 %v85
    %v114 = vunpack.c.h.s8.bf16 %v84
    %v115 = vunpack.c.h.s8.bf16 %v85
    %v116 = vunpack.c.l.s8.bf16 %v86
    %v117 = vunpack.c.l.s8.bf16 %v87
    %v118 = vunpack.c.h.s8.bf16 %v86
    %v119 = vunpack.c.h.s8.bf16 %v87
    %120 = vmatprep.subr.bf16.mxu0 %v103
    %121 = vmatpush1.bf16.msra.mxu0 %v102
    %122 = vmatprep.subr.bf16.mxu0 %v101
    %123 = vmatpush1.bf16.msra.mxu0 %v100
    %124 = vmatprep.subr.bf16.mxu0 %v99
    %125 = vmatpush1.bf16.msra.mxu0 %v98
    %126 = vmatprep.subr.bf16.mxu0 %v97
    %127 = vmatpush1.bf16.msra.mxu0 %v96
    %128 = vmatprep.subr.bf16.mxu0 %v95
    %129 = vmatpush1.bf16.msra.mxu0 %v94
    %130 = vmatprep.subr.bf16.mxu0 %v93
    %131 = vmatpush1.bf16.msra.mxu0 %v92
    %132 = vmatprep.subr.bf16.mxu0 %v91
    %133 = vmatpush1.bf16.msra.mxu0 %v90
    %134 = vmatprep.subr.bf16.mxu0 %v89
    %135 = vmatpush1.bf16.msra.mxu0 %v88
    %136 = vmatprep.subr.bf16.mxu0 %v119
    %137 = vmatpush2.bf16.msra.mxu0 %v118
    %138 = vmatprep.subr.bf16.mxu0 %v117
    %139 = vmatpush2.bf16.msra.mxu0 %v116
    %140 = vmatprep.subr.bf16.mxu0 %v115
    %141 = vmatpush2.bf16.msra.mxu0 %v114
    %142 = vmatprep.subr.bf16.mxu0 %v113
    %143 = vmatpush2.bf16.msra.mxu0 %v112
    %144 = vmatprep.subr.bf16.mxu0 %v111
    %145 = vmatpush2.bf16.msra.mxu0 %v110
    %146 = vmatprep.subr.bf16.mxu0 %v109
    %147 = vmatpush2.bf16.msra.mxu0 %v108
    %148 = vmatprep.subr.bf16.mxu0 %v107
    %149 = vmatpush2.bf16.msra.mxu0 %v106
    %150 = vmatprep.subr.bf16.mxu0 %v105
    %151 = vmatpush2.bf16.msra.mxu0 %v104
    %152 = vmatprep.mubr.bf16.mxu0 %v71
    %153 = vmatmul.mubr.bf16.gmra.mxu0 %v70
    %v154 = vpop.f32.mrf.mxu0
    %v155 = vadd.f32 0.0, %v154
    %v156 = vpop.f32.mrf.mxu0
    %v157 = vadd.f32 0.0, %v156
    %v158 = vpop.f32.mrf.mxu0
    %v159 = vadd.f32 0.0, %v158
    %v160 = vpop.f32.mrf.mxu0
    %v161 = vadd.f32 0.0, %v160
    %162 = vdwg.mxu0
    %v163 = vadd.f32 %v62, %v155
    %v164 = vadd.f32 %v63, %v157
    %v165 = vadd.f32 %v64, %v159
    %v166 = vadd.f32 %v65, %v161
    %167 = vst [vmem:[#allocation2] sm:$0xff] %v163
    %168 = vst [vmem:[#allocation2 + $0x8] sm:$0xff] %v164
    %169 = vst [vmem:[#allocation2 + $0x10] sm:$0xff] %v165
    %170 = vst [vmem:[#allocation2 + $0x18] sm:$0xff] %v166
    // Predicated region
    $region30: #{tpu_custom_call.1} parent=1 // pred_check
      %p171 = pneg %p54
    $region31: #{tpu_custom_call.1} parent=1 // pred_check_branch
      %173 = sbr.rel (%p171) target = $region33
    $region32: #{tpu_custom_call.1} parent=1 // pred_region
      %v174 = vld [vmem:[#allocation8] ss:$2 sm:$0x3]
      %s175 = scalar_lea.vmem [#allocation8], 1
      %v176 = vld [vmem:[%s175] ss:$2 sm:$0x3]
      %v177 = vld [vmem:[#allocation2] sm:$0xff]
      %v178 = vld [vmem:[#allocation2 + $0x8] sm:$0xff]
      %v179 = vld [vmem:[#allocation2 + $0x10] sm:$0xff]
      %v180 = vld [vmem:[#allocation2 + $0x18] sm:$0xff]
      %v182 = vlaneseq
      %v183 = vshrl.u32 %v182, 7
      %v184 = vsub.s32 0, %v183
      %v185 = vrot.slane %v174, %v184
      %v186 = vlaneseq
      %v187 = vshrl.u32 %v186, 7
      %v188 = vsub.s32 1, %v187
      %v189 = vrot.slane %v174, %v188
      %v192 = vmul.f32 %v177, %v185
      %v193 = vmul.f32 %v178, %v189
      %v194 = vmul.f32 %v179, %v185
      %v195 = vmul.f32 %v180, %v189
      %v197 = vlaneseq
      %v198 = vshrl.u32 %v197, 7
      %v199 = vsub.s32 0, %v198
      %v200 = vrot.slane %v176, %v199
      %v201 = vlaneseq
      %v202 = vshrl.u32 %v201, 7
      %v203 = vsub.s32 1, %v202
      %v204 = vrot.slane %v176, %v203
      %v207 = vadd.f32 %v192, %v200
      %v208 = vadd.f32 %v193, %v204
      %v209 = vadd.f32 %v194, %v200
      %v210 = vadd.f32 %v195, %v204
      %211 = vst [vmem:[#allocation9] sm:$0xff] %v207
      %212 = vst [vmem:[#allocation9 + $0x8] sm:$0xff] %v208
      %213 = vst [vmem:[#allocation9 + $0x10] sm:$0xff] %v209
      %214 = vst [vmem:[#allocation9 + $0x18] sm:$0xff] %v210
    $region33: #{tpu_custom_call.1} parent=1 // pred_fallthru
      _
    // Predicated region
    $region34: #{tpu_custom_call.1} parent=1 // pred_check
      _
    $region35: #{tpu_custom_call.1} parent=1 // pred_check_branch
      %216 = sbr.rel (0) target = $region37
    $region36: #{tpu_custom_call.1} parent=1 // pred_region
      %s218 = ssub.s32 512, 512
      %219 = vsyncadd [#allocation5], %s218
      %s220 = sshll.u32 [#allocation9], 4
      %s221 = int_to_ptr.vmem [resolvable:$true] %s220
      %226 = dma.vmem_to_hbm [thread:$0]  %s221, 512, %s3, [#allocation5], 256, 256, 16
    $region37: #{tpu_custom_call.1} parent=1 // pred_fallthru
      _
    // Predicated region
    $region38: #{tpu_custom_call.1} parent=1 // pred_check
      _
    $region39: #{tpu_custom_call.1} parent=1 // pred_check_branch
      %228 = sbr.rel (0) target = $region41
    $region40: #{tpu_custom_call.1} parent=1 // pred_region
      %229 = dma.done [#allocation5], 512
    $region41: #{tpu_custom_call.1} parent=1 // pred_fallthru
      _
    %230 = vsyncpa [#allocation4], 1
    %231 = vsyncpa [#allocation7], 1
    %232 = vsyncpa [#allocation5], 1

</llo_original>
